<compile_context>
chip_gen: v7x
topology: tpu7x:2x2x1
jax: 0.10.0
libtpu: 0.0.40
codegen_flags: <defaults>
</compile_context>

<pallas_src>
import functools

import jax
import jax.numpy as jnp
from jax.experimental import pallas as pl
from jax.experimental.pallas import tpu as pltpu


def pointnetpp_kernel(x_ref, w1_ref, t1_ref, w2_ref, t2_ref, o_ref, *, bf16_epilogue):
    # x_ref: (Bt, Nt, Din) bf16 slab.  Flatten to one (Bt*Nt, Din) matmul so the MXU M
    # dimension is Bt*Nt (~1-4K rows) instead of N (or 1).
    bt, nt, din = x_ref.shape
    n = pl.program_id(1)

    x = x_ref[...].reshape(bt * nt, din)                                    # bf16

    # mlp1: 1x1 conv (+ folded BN scale) -> shift -> ReLU
    acc1 = jnp.dot(x, w1_ref[...], preferred_element_type=jnp.float32)      # (rows, 64) f32
    if bf16_epilogue:
        h1 = jnp.maximum(acc1.astype(jnp.bfloat16) + t1_ref[...].astype(jnp.bfloat16), 0.0)
    else:
        h1 = jnp.maximum(acc1 + t1_ref[...], 0.0).astype(jnp.bfloat16)

    # mlp2
    acc2 = jnp.dot(h1, w2_ref[...], preferred_element_type=jnp.float32)     # (rows, F) f32
    if bf16_epilogue:
        h2 = jnp.maximum(acc2.astype(jnp.bfloat16) + t2_ref[...].astype(jnp.bfloat16), 0.0)
    else:
        h2 = jnp.maximum(acc2 + t2_ref[...], 0.0)

    # Partial max over this tile's points (sublane-axis reduce; exact in any dtype).
    tile_max = jnp.max(h2.reshape(bt, nt, -1), axis=1)                      # (Bt, F)
    tile_max = tile_max.astype(o_ref.dtype)[None]                           # (1, Bt, F)

    # Running max accumulated directly in the resident output block (block index is
    # constant along the inner n axis, so it stays in VMEM until the batch tile changes).
    @pl.when(n == 0)
    def _():
        o_ref[...] = tile_max

    @pl.when(n > 0)
    def _():
        o_ref[...] = jnp.maximum(o_ref[...], tile_max)


def _device_tuning():
    """Per-TPU-generation (row-tile, vmem_limit_bytes, bf16_epilogue) choices."""
    kind = ""
    try:
        kind = jax.devices()[0].device_kind.lower()
    except Exception:
        pass
    if "v7" in kind:    # 2 TCs, 64 MiB physical VMEM, bf16 VALU
        return 2048, 48 * 1024 * 1024, True
    if "v6" in kind:    # 128 MiB physical VMEM, bf16 VALU
        return 4096, 64 * 1024 * 1024, True
    if "v5" in kind:    # 128 MiB physical VMEM, no bf16 VALU -> f32 epilogue
        return 4096, 64 * 1024 * 1024, False
    return 1024, None, False   # conservative defaults for unknown chips


def _pick_batch_tile(B, target=8):
    """Largest divisor of B that is <= min(target, B // 2); guarantees >= 2 steps on the
    'parallel' batch grid axis whenever B >= 2 so both v7x TensorCores get work."""
    if B < 2:
        return B
    cap = max(1, min(target, B // 2))
    bt = 1
    for cand in range(1, cap + 1):
        if B % cand == 0:
            bt = cand
    return bt


def _pick_point_tile(N, target):
    """Point tile that divides N exactly and keeps blocks sublane-legal: the largest
    multiple-of-8 divisor <= target, else the smallest one above it, else N itself."""
    target = max(8, target)
    if N <= target:
        return N
    start = (min(N, target) // 8) * 8
    for nt in range(start, 0, -8):          # largest multiple-of-8 divisor <= target
        if N % nt == 0:
            return nt
    for nt in range(start + 8, N, 8):       # bounded fallback above target
        if N % nt == 0:
            return nt
    return N                                # e.g. odd prime N: single full tile


def pointnetpp_forward(x, params, *, target_rows=None, vmem_limit_bytes=None,
                       bf16_epilogue=None):
    """x: (B, N, input_dim) float32.  Returns (B, feature_dim) float32."""
    B, N, Din = x.shape
    w1, t1, w2, t2, wfc_t, bfc = params
    H = w1.shape[1]            # 64
    F = w2.shape[1]            # feature_dim

    auto_rows, auto_vmem, auto_bf16 = _device_tuning()
    if target_rows is None:
        target_rows = auto_rows
    if vmem_limit_bytes is None:
        vmem_limit_bytes = auto_vmem
    if bf16_epilogue is None:
        bf16_epilogue = auto_bf16

    Bt = _pick_batch_tile(B)
    Nt = _pick_point_tile(N, max(8, target_rows // Bt))
    G = B // Bt

    x_bf16 = x.astype(jnp.bfloat16)

    const = lambda shape: pl.BlockSpec(shape, lambda b, n: (0,) * len(shape))

    flops = 2 * B * N * (Din * H + H * F)
    bytes_accessed = (x_bf16.size * 2 + w1.size * 2 + w2.size * 2
                      + (t1.size + t2.size) * 4 + B * F * 4)

    kernel = functools.partial(pointnetpp_kernel, bf16_epilogue=bf16_epilogue)

    pooled = pl.pallas_call(
        kernel,
        # Pooled features grouped as (B//Bt, Bt, F): the output block's last two dims
        # always span full array dims, so any Bt (even < 8) yields a legal block.
        out_shape=jax.ShapeDtypeStruct((G, Bt, F), jnp.float32),
        grid_spec=pltpu.PrefetchScalarGridSpec(
            num_scalar_prefetch=0,
            grid=(G, N // Nt),
            in_specs=[
                pl.BlockSpec((Bt, Nt, Din), lambda b, n: (b, n, 0)),   # x (bf16)
                const((Din, H)),                                       # w1 (bf16, BN scale folded)
                const((1, H)),                                         # t1 (f32 shift)
                const((H, F)),                                         # w2 (bf16, BN scale folded)
                const((1, F)),                                         # t2 (f32 shift)
            ],
            out_specs=pl.BlockSpec((1, Bt, F), lambda b, n: (b, 0, 0)),
        ),
        compiler_params=pltpu.CompilerParams(
            dimension_semantics=("parallel", "arbitrary"),
            vmem_limit_bytes=vmem_limit_bytes,
        ),
        cost_estimate=pl.CostEstimate(flops=flops, transcendentals=0,
                                      bytes_accessed=bytes_accessed),
    )(x_bf16, w1, t1, w2, t2)

    pooled = pooled.reshape(B, F)
    # Final Linear(F, F): hoisted out of the kernel (runs once with M=B in XLA and keeps
    # the (F, F) weight out of the kernel's VMEM budget).
    return pooled @ wfc_t + bfc


def make_params(key, input_dim, feature_dim):
    """Deterministic synthetic parameters matching the PyTorch module's shapes.

    BN (inference mode) scale is folded into the conv weight columns; conv bias and BN
    shift are folded into a single per-channel shift.
    """
    H = 64
    eps = 1e-5
    ks = jax.random.split(key, 10)

    # Conv1d(input_dim, 64, 1): weight (64, input_dim, 1), bias (64,)
    w1 = jax.random.normal(ks[0], (H, input_dim), jnp.float32) * 0.1
    b1 = jax.random.normal(ks[1], (H,), jnp.float32) * 0.1
    g1 = 1.0 + 0.05 * jax.random.normal(ks[2], (H,), jnp.float32)
    beta1 = 0.05 * jax.random.normal(ks[3], (H,), jnp.float32)
    mean1 = jnp.zeros((H,), jnp.float32)
    var1 = jnp.ones((H,), jnp.float32)
    s1 = g1 / jnp.sqrt(var1 + eps)
    t1 = beta1 - mean1 * s1 + b1 * s1
    w1f = w1.T * s1[None, :]                       # (Din, 64), BN scale folded into columns

    # Conv1d(64, feature_dim, 1)
    w2 = jax.random.normal(ks[4], (feature_dim, H), jnp.float32) * 0.1
    b2 = jax.random.normal(ks[5], (feature_dim,), jnp.float32) * 0.1
    g2 = 1.0 + 0.05 * jax.random.normal(ks[6], (feature_dim,), jnp.float32)
    beta2 = 0.05 * jax.random.normal(ks[7], (feature_dim,), jnp.float32)
    mean2 = jnp.zeros((feature_dim,), jnp.float32)
    var2 = jnp.ones((feature_dim,), jnp.float32)
    s2 = g2 / jnp.sqrt(var2 + eps)
    t2 = beta2 - mean2 * s2 + b2 * s2
    w2f = w2.T * s2[None, :]                       # (64, F)

    # Linear(feature_dim, feature_dim)
    wfc = jax.random.normal(ks[8], (feature_dim, feature_dim), jnp.float32) * 0.1
    bfc = jax.random.normal(ks[9], (feature_dim,), jnp.float32) * 0.1

    return (
        w1f.astype(jnp.bfloat16),                  # (Din, 64)  bf16
        t1[None, :].astype(jnp.float32),           # (1, 64)
        w2f.astype(jnp.bfloat16),                  # (64, F)    bf16
        t2[None, :].astype(jnp.float32),           # (1, F)
        wfc.T.astype(jnp.float32),                 # (F, F) transposed for row-vector matmul
        bfc[None, :].astype(jnp.float32),          # (1, F)
    )


def reference_forward(x, params):
    """Pure-JAX f32 reference of the module semantics (BN folded the same way)."""
    w1, t1, w2, t2, wfc_t, bfc = params
    w1 = w1.astype(jnp.float32)
    w2 = w2.astype(jnp.float32)
    h1 = jnp.maximum(x @ w1 + t1, 0.0)
    h2 = jnp.maximum(h1 @ w2 + t2, 0.0)
    pooled = jnp.max(h2, axis=1)
    return pooled @ wfc_t + bfc


def _check(B, N, input_dim, feature_dim, key):
    kx, kp = jax.random.split(key)
    x = jax.random.normal(kx, (B, N, input_dim), jnp.float32)
    params = make_params(kp, input_dim, feature_dim)
    out = jax.block_until_ready(pointnetpp_forward(x, params))
    ref = reference_forward(x, params)
    assert out.shape == (B, feature_dim)
    # bf16 matmul inputs (and bf16 epilogue on v6e/v7x) vs an f32 reference.
    assert jnp.allclose(out, ref, atol=5e-2, rtol=5e-2), "Pallas output mismatch vs JAX reference"


if __name__ == "__main__":
    key = jax.random.PRNGKey(0)
    k0, k1 = jax.random.split(key)

    # Small shapes consistent with the module (2 batch-parallel grid steps).
    _check(B=2, N=16, input_dim=4, feature_dim=32, key=k0)
    # Slightly larger case exercising the batch-parallel axis + tiled running max.
    _check(B=8, N=256, input_dim=4, feature_dim=128, key=k1)

    print("KERNEL_OK")
</pallas_src>

<mosaic_0001>
module attributes {stable_mosaic.version = 11 : i64} {
  func.func @pointnetpp_kernel(%arg0: i32, %arg1: i32, %arg2: memref<1x16x4xbf16, #tpu.memory_space<vmem>>, %arg3: memref<4x64xbf16, #tpu.memory_space<vmem>>, %arg4: memref<1x64xf32, #tpu.memory_space<vmem>>, %arg5: memref<64x32xbf16, #tpu.memory_space<vmem>>, %arg6: memref<1x32xf32, #tpu.memory_space<vmem>>, %arg7: memref<1x1x32xf32, #tpu.memory_space<vmem>>) attributes {dimension_semantics = [#tpu.dimension_semantics<parallel>, #tpu.dimension_semantics<arbitrary>], iteration_bounds = array<i64: 2, 1>, scalar_prefetch = 0 : i64, scratch_operands = 0 : i64, tpu.core_type = #tpu.core_type<tc>, window_params = [{transform_indices = @transform_0, window_bounds = array<i64: 1, 16, 4>}, {pipeline_mode = #tpu.pipeline_mode<synchronous>, transform_indices = @transform_1, window_bounds = array<i64: 4, 64>}, {pipeline_mode = #tpu.pipeline_mode<synchronous>, transform_indices = @transform_2, window_bounds = array<i64: 1, 64>}, {pipeline_mode = #tpu.pipeline_mode<synchronous>, transform_indices = @transform_3, window_bounds = array<i64: 64, 32>}, {pipeline_mode = #tpu.pipeline_mode<synchronous>, transform_indices = @transform_4, window_bounds = array<i64: 1, 32>}, {transform_indices = @transform_5, window_bounds = array<i64: 1, 1, 32>}]} {
    %c0 = arith.constant 0 : index
    %c0_0 = arith.constant 0 : index
    %c0_1 = arith.constant 0 : index
    %0 = vector.load %arg2[%c0, %c0_0, %c0_1] : memref<1x16x4xbf16, #tpu.memory_space<vmem>>, vector<1x16x4xbf16>
    %1 = vector.shape_cast %0 : vector<1x16x4xbf16> to vector<16x4xbf16>
    %c0_2 = arith.constant 0 : index
    %c0_3 = arith.constant 0 : index
    %2 = vector.load %arg3[%c0_2, %c0_3] : memref<4x64xbf16, #tpu.memory_space<vmem>>, vector<4x64xbf16>
    %cst = arith.constant dense<0.000000e+00> : vector<16x64xf32>
    %3 = tpu.matmul %1, %2, %cst {dimension_numbers = #tpu.dot_dimension_numbers<[1], [0], [0], [1], [0, 0, 1, 1], [], []>} : vector<16x4xbf16>, vector<4x64xbf16>, vector<16x64xf32> -> vector<16x64xf32>
    %c0_4 = arith.constant 0 : index
    %c0_5 = arith.constant 0 : index
    %4 = vector.load %arg4[%c0_4, %c0_5] : memref<1x64xf32, #tpu.memory_space<vmem>>, vector<1x64xf32>
    %5 = vector.broadcast %4 : vector<1x64xf32> to vector<16x64xf32>
    %6 = arith.addf %3, %5 : vector<16x64xf32>
    %cst_6 = arith.constant 0.000000e+00 : f32
    %7 = vector.broadcast %cst_6 : f32 to vector<16x64xf32>
    %8 = arith.maximumf %6, %7 : vector<16x64xf32>
    %9 = arith.truncf %8 : vector<16x64xf32> to vector<16x64xbf16>
    %c0_7 = arith.constant 0 : index
    %c0_8 = arith.constant 0 : index
    %10 = vector.load %arg5[%c0_7, %c0_8] : memref<64x32xbf16, #tpu.memory_space<vmem>>, vector<64x32xbf16>
    %cst_9 = arith.constant dense<0.000000e+00> : vector<16x32xf32>
    %11 = tpu.matmul %9, %10, %cst_9 {dimension_numbers = #tpu.dot_dimension_numbers<[1], [0], [0], [1], [0, 0, 1, 1], [], []>} : vector<16x64xbf16>, vector<64x32xbf16>, vector<16x32xf32> -> vector<16x32xf32>
    %c0_10 = arith.constant 0 : index
    %c0_11 = arith.constant 0 : index
    %12 = vector.load %arg6[%c0_10, %c0_11] : memref<1x32xf32, #tpu.memory_space<vmem>>, vector<1x32xf32>
    %13 = vector.broadcast %12 : vector<1x32xf32> to vector<16x32xf32>
    %14 = arith.addf %11, %13 : vector<16x32xf32>
    %cst_12 = arith.constant 0.000000e+00 : f32
    %15 = vector.broadcast %cst_12 : f32 to vector<16x32xf32>
    %16 = arith.maximumf %14, %15 : vector<16x32xf32>
    %17 = vector.shape_cast %16 : vector<16x32xf32> to vector<1x16x32xf32>
    %cst_13 = arith.constant dense<0xFF800000> : vector<1x32xf32>
    %18 = vector.multi_reduction <maximumf>, %17, %cst_13 [1] : vector<1x16x32xf32> to vector<1x32xf32>
    %19 = vector.shape_cast %18 : vector<1x32xf32> to vector<1x1x32xf32>
    %c0_i32 = arith.constant 0 : i32
    %20 = arith.cmpi eq, %arg1, %c0_i32 : i32
    %21 = arith.extui %20 : i1 to i32
    %c0_i32_14 = arith.constant 0 : i32
    %22 = arith.cmpi ne, %21, %c0_i32_14 : i32
    scf.if %22 {
      %c0_17 = arith.constant 0 : index
      %c0_18 = arith.constant 0 : index
      %c0_19 = arith.constant 0 : index
      %26 = vector.load %arg7[%c0_17, %c0_18, %c0_19] : memref<1x1x32xf32, #tpu.memory_space<vmem>>, vector<1x1x32xf32>
      tpu.vector_store %arg7[%c0_17, %c0_18, %c0_19], %19 {strides = array<i32>} : memref<1x1x32xf32, #tpu.memory_space<vmem>>, vector<1x1x32xf32>,
    } else {
    }
    %c0_i32_15 = arith.constant 0 : i32
    %23 = arith.cmpi sgt, %arg1, %c0_i32_15 : i32
    %24 = arith.extui %23 : i1 to i32
    %c0_i32_16 = arith.constant 0 : i32
    %25 = arith.cmpi ne, %24, %c0_i32_16 : i32
    scf.if %25 {
      %c0_17 = arith.constant 0 : index
      %c0_18 = arith.constant 0 : index
      %c0_19 = arith.constant 0 : index
      %26 = vector.load %arg7[%c0_17, %c0_18, %c0_19] : memref<1x1x32xf32, #tpu.memory_space<vmem>>, vector<1x1x32xf32>
      %27 = arith.maximumf %26, %19 : vector<1x1x32xf32>
      %c0_20 = arith.constant 0 : index
      %c0_21 = arith.constant 0 : index
      %c0_22 = arith.constant 0 : index
      %28 = vector.load %arg7[%c0_20, %c0_21, %c0_22] : memref<1x1x32xf32, #tpu.memory_space<vmem>>, vector<1x1x32xf32>
      tpu.vector_store %arg7[%c0_20, %c0_21, %c0_22], %27 {strides = array<i32>} : memref<1x1x32xf32, #tpu.memory_space<vmem>>, vector<1x1x32xf32>,
    } else {
    }
    return
  }
  func.func @transform_0(%arg0: i32, %arg1: i32) -> (i32, i32, i32) {
    %c0_i32 = arith.constant 0 : i32
    %c0_i32_0 = arith.constant 0 : i32
    return %arg0, %arg1, %c0_i32 : i32, i32, i32
  }
  func.func @transform_1(%arg0: i32, %arg1: i32) -> (i32, i32) {
    %c0_i32 = arith.constant 0 : i32
    %c0_i32_0 = arith.constant 0 : i32
    %c0_i32_1 = arith.constant 0 : i32
    return %c0_i32, %c0_i32_0 : i32, i32
  }
  func.func @transform_2(%arg0: i32, %arg1: i32) -> (i32, i32) {
    %c0_i32 = arith.constant 0 : i32
    %c0_i32_0 = arith.constant 0 : i32
    %c0_i32_1 = arith.constant 0 : i32
    return %c0_i32, %c0_i32_0 : i32, i32
  }
  func.func @transform_3(%arg0: i32, %arg1: i32) -> (i32, i32) {
    %c0_i32 = arith.constant 0 : i32
    %c0_i32_0 = arith.constant 0 : i32
    %c0_i32_1 = arith.constant 0 : i32
    return %c0_i32, %c0_i32_0 : i32, i32
  }
  func.func @transform_4(%arg0: i32, %arg1: i32) -> (i32, i32) {
    %c0_i32 = arith.constant 0 : i32
    %c0_i32_0 = arith.constant 0 : i32
    %c0_i32_1 = arith.constant 0 : i32
    return %c0_i32, %c0_i32_0 : i32, i32
  }
  func.func @transform_5(%arg0: i32, %arg1: i32) -> (i32, i32, i32) {
    %c0_i32 = arith.constant 0 : i32
    %c0_i32_0 = arith.constant 0 : i32
    %c0_i32_1 = arith.constant 0 : i32
    return %arg0, %c0_i32, %c0_i32_0 : i32, i32, i32
  }
}

</mosaic_0001>

<llo_original>
// kernel: tpu_custom_call.1
$region0: #{tpu_custom_call.1}
  #allocation0 [shape = 'u32[]', space=smem, size = 0x4, offset = 0x4, fixed_abs, tag = 'smem constant byte address 0x4 - core index']
  #allocation1 [shape = 'u32[144,128]{1,0:T(1,128)}', space=vmem, size = 0x12000, scoped, tag = 'internal scratch']
  %s0 = inlined_call_operand.vmem [shape: bf16[2,16,4], index: 0, kind: input, shape index: {}]
  %s1 = inlined_call_operand.vmem [shape: bf16[4,64], index: 1, kind: input, shape index: {}]
  %s2 = inlined_call_operand.vmem [shape: f32[1,64], index: 2, kind: input, shape index: {}]
  %s3 = inlined_call_operand.vmem [shape: bf16[64,32], index: 3, kind: input, shape index: {}]
  %s4 = inlined_call_operand.vmem [shape: f32[1,32], index: 4, kind: input, shape index: {}]
  %s5 = inlined_call_operand.hbm [shape: f32[2,1,32], index: 5, kind: output, shape index: {}]
  %s6 = sld [smem:[#allocation0]]
  $region61: #{tpu_custom_call.1} parent=0
    _
  %s8 = ssub.s32 1, %s6
  %s9 = scalar_select 0, %s8, %s6
  $region1: #{tpu_custom_call.1} parent=0
    #allocation2 [shape = 'u8[1024]{0}', space=vmem, size = 0x400, scoped, tag = 'output window, operand 0']
    #allocation3 [shape = 's32[2]{0}', space=sflag, size = 0x8, scoped, tag = 'scoped memory for tpu_custom_call.1']
    %10 = vsyncpa [#allocation3], 0
    %s11 = scalar_lea.sflag [#allocation3], 1
    %12 = vsyncpa %s11, 0
    loop: start=0, step=1, limit=4
    $region2: #{tpu_custom_call.1} parent=1 // loop_pre_header
      _
    $region3: #{tpu_custom_call.1} parent=1 // loop_header
      %s14 = sphi 0, %s18
      %p15 = scmp.ge.s32.totalorder %s14, 4
      %s21 = sphi 0, %s33
      %s22 = sphi 0, %s29
      %s23 = sphi 0, %s21
      %s24 = sphi 0, %s22
      %s25 = sphi 0, %s23
      %s26 = sphi 0, %s24
      %s38 = sphi 0, %s40
      %s41 = sphi 0, %s38
      %s42 = sphi 0, %s41
      %s58 = sphi 0, %s42
      %s62 = sphi 0, %s62
      %s64 = sphi 0, %s62
      %s65 = sphi 0, %s64
      %s79 = sphi 0, %s65
      %s83 = sphi 0, %s83
      %s85 = sphi 0, %s83
      %s86 = sphi 0, %s85
      %s100 = sphi 0, %s86
      %s104 = sphi 0, %s104
      %s106 = sphi 0, %s104
      %s107 = sphi 0, %s106
      %s121 = sphi 0, %s107
      %s125 = sphi 0, %s125
      %s127 = sphi 0, %s125
      %s128 = sphi 0, %s127
      %s142 = sphi 0, %s128
      %s148 = sphi 0, %s150
      %s151 = sphi 0, %s148
      %s152 = sphi 0, %s151
      %s168 = sphi 0, %s152
    $region4: #{tpu_custom_call.1} parent=1 // loop_header_branch
      %17 = sbr.rel (%p15) target = $region8
    $region5: #{tpu_custom_call.1} parent=1 // loop_body
      %s19 = ssub.s32 %s14, 1
      %s20 = ssub.s32 %s14, 2
      %s27 = sadd.s32 1, %s22
      %p28 = scmp.ge.s32.totalorder %s27, 1
      %s29 = scalar_select %p28, 0, %s27
      %s30 = sadd.s32 1, %s21
      %s31 = scalar_select %p28, %s30, %s21
      %p32 = scmp.ge.s32.totalorder %s31, 2
      %s33 = scalar_select %p32, 0, %s31
      %s34 = ssub.s32 %s21, %s33
      %s35 = ssub.s32 %s22, %s29
      %s36 = sor.u32 %s34, %s35
      %p37 = scmp.eq.s32.totalorder %s36, 0
      %s39 = sadd.s32 %s38, 1
      %s40 = scalar_select %p37, %s38, %s39
      %p43 = pneg %p37
      %p44 = scmp.eq.s32.totalorder %s14, 1
      %p45 = por %p43, %p44
      %p46 = scmp.ne.s32.totalorder %s38, %s41
      %p47 = scmp.eq.s32.totalorder %s14, 0
      %p48 = por %p46, %p47
      %p49 = scmp.ne.s32.totalorder %s38, %s41
      %p50 = scmp.eq.s32.totalorder %s19, 1
      %p51 = por %p49, %p50
      %p52 = scmp.ne.s32.totalorder %s41, %s42
      %p53 = scmp.eq.s32.totalorder %s19, 0
      %p54 = por %p52, %p53
      %p55 = scmp.ne.s32.totalorder %s41, %s42
      %p56 = scmp.eq.s32.totalorder %s20, 1
      %p57 = por %p55, %p56
      %p59 = scmp.ne.s32.totalorder %s42, %s58
      %p60 = scmp.eq.s32.totalorder %s20, 0
      %p61 = por %p59, %p60
      %s63 = sadd.s32 %s62, 1
      %p66 = scmp.eq.s32.totalorder %s14, 1
      %p67 = scmp.ne.s32.totalorder %s62, %s64
      %p68 = scmp.eq.s32.totalorder %s14, 0
      %p69 = por %p67, %p68
      %p70 = scmp.ne.s32.totalorder %s62, %s64
      %p71 = scmp.eq.s32.totalorder %s19, 1
      %p72 = por %p70, %p71
      %p73 = scmp.ne.s32.totalorder %s64, %s65
      %p74 = scmp.eq.s32.totalorder %s19, 0
      %p75 = por %p73, %p74
      %p76 = scmp.ne.s32.totalorder %s64, %s65
      %p77 = scmp.eq.s32.totalorder %s20, 1
      %p78 = por %p76, %p77
      %p80 = scmp.ne.s32.totalorder %s65, %s79
      %p81 = scmp.eq.s32.totalorder %s20, 0
      %p82 = por %p80, %p81
      %s84 = sadd.s32 %s83, 1
      %p87 = scmp.eq.s32.totalorder %s14, 1
      %p88 = scmp.ne.s32.totalorder %s83, %s85
      %p89 = scmp.eq.s32.totalorder %s14, 0
      %p90 = por %p88, %p89
      %p91 = scmp.ne.s32.totalorder %s83, %s85
      %p92 = scmp.eq.s32.totalorder %s19, 1
      %p93 = por %p91, %p92
      %p94 = scmp.ne.s32.totalorder %s85, %s86
      %p95 = scmp.eq.s32.totalorder %s19, 0
      %p96 = por %p94, %p95
      %p97 = scmp.ne.s32.totalorder %s85, %s86
      %p98 = scmp.eq.s32.totalorder %s20, 1
      %p99 = por %p97, %p98
      %p101 = scmp.ne.s32.totalorder %s86, %s100
      %p102 = scmp.eq.s32.totalorder %s20, 0
      %p103 = por %p101, %p102
      %s105 = sadd.s32 %s104, 1
      %p108 = scmp.eq.s32.totalorder %s14, 1
      %p109 = scmp.ne.s32.totalorder %s104, %s106
      %p110 = scmp.eq.s32.totalorder %s14, 0
      %p111 = por %p109, %p110
      %p112 = scmp.ne.s32.totalorder %s104, %s106
      %p113 = scmp.eq.s32.totalorder %s19, 1
      %p114 = por %p112, %p113
      %p115 = scmp.ne.s32.totalorder %s106, %s107
      %p116 = scmp.eq.s32.totalorder %s19, 0
      %p117 = por %p115, %p116
      %p118 = scmp.ne.s32.totalorder %s106, %s107
      %p119 = scmp.eq.s32.totalorder %s20, 1
      %p120 = por %p118, %p119
      %p122 = scmp.ne.s32.totalorder %s107, %s121
      %p123 = scmp.eq.s32.totalorder %s20, 0
      %p124 = por %p122, %p123
      %s126 = sadd.s32 %s125, 1
      %p129 = scmp.eq.s32.totalorder %s14, 1
      %p130 = scmp.ne.s32.totalorder %s125, %s127
      %p131 = scmp.eq.s32.totalorder %s14, 0
      %p132 = por %p130, %p131
      %p133 = scmp.ne.s32.totalorder %s125, %s127
      %p134 = scmp.eq.s32.totalorder %s19, 1
      %p135 = por %p133, %p134
      %p136 = scmp.ne.s32.totalorder %s127, %s128
      %p137 = scmp.eq.s32.totalorder %s19, 0
      %p138 = por %p136, %p137
      %p139 = scmp.ne.s32.totalorder %s127, %s128
      %p140 = scmp.eq.s32.totalorder %s20, 1
      %p141 = por %p139, %p140
      %p143 = scmp.ne.s32.totalorder %s128, %s142
      %p144 = scmp.eq.s32.totalorder %s20, 0
      %p145 = por %p143, %p144
      %s146 = ssub.s32 %s21, %s33
      %p147 = scmp.eq.s32.totalorder %s146, 0
      %s149 = sadd.s32 %s148, 1
      %s150 = scalar_select %p147, %s148, %s149
      %p153 = pneg %p147
      %p154 = scmp.eq.s32.totalorder %s14, 1
      %p155 = por %p153, %p154
      %p156 = scmp.ne.s32.totalorder %s148, %s151
      %p157 = scmp.eq.s32.totalorder %s14, 0
      %p158 = por %p156, %p157
      %p159 = scmp.ne.s32.totalorder %s148, %s151
      %p160 = scmp.eq.s32.totalorder %s19, 1
      %p161 = por %p159, %p160
      %p162 = scmp.ne.s32.totalorder %s151, %s152
      %p163 = scmp.eq.s32.totalorder %s19, 0
      %p164 = por %p162, %p163
      %p165 = scmp.ne.s32.totalorder %s151, %s152
      %p166 = scmp.eq.s32.totalorder %s20, 1
      %p167 = por %p165, %p166
      %p169 = scmp.ne.s32.totalorder %s152, %s168
      %p170 = scmp.eq.s32.totalorder %s20, 0
      %p171 = por %p169, %p170
      %p172 = scmp.le.s32.totalorder 1, %s14
      %p173 = scmp.lt.s32.totalorder %s14, 3
      %p174 = pnand %p172, %p173
      %p175 = pneg %p174
      // Predicated region
      $region9: #{tpu_custom_call.1} parent=5 // pred_check
        _
      $region10: #{tpu_custom_call.1} parent=5 // pred_check_branch
        %177 = sbr.rel (%p174) target = $region12
      $region11: #{tpu_custom_call.1} parent=5 // pred_region
        %s178 = ssub.s32 %s14, 1
        // Predicated region
        $region13: #{tpu_custom_call.1} parent=11 // pred_check
          %p179 = pneg %p75
        $region14: #{tpu_custom_call.1} parent=11 // pred_check_branch
          %181 = sbr.rel (%p179) target = $region16
        $region15: #{tpu_custom_call.1} parent=11 // pred_region
          _
        $region16: #{tpu_custom_call.1} parent=11 // pred_fallthru
          _
        // Predicated region
        $region17: #{tpu_custom_call.1} parent=11 // pred_check
          %p182 = pneg %p96
        $region18: #{tpu_custom_call.1} parent=11 // pred_check_branch
          %184 = sbr.rel (%p182) target = $region20
        $region19: #{tpu_custom_call.1} parent=11 // pred_region
          _
        $region20: #{tpu_custom_call.1} parent=11 // pred_fallthru
          _
        // Predicated region
        $region21: #{tpu_custom_call.1} parent=11 // pred_check
          %p185 = pneg %p117
        $region22: #{tpu_custom_call.1} parent=11 // pred_check_branch
          %187 = sbr.rel (%p185) target = $region24
        $region23: #{tpu_custom_call.1} parent=11 // pred_region
          _
        $region24: #{tpu_custom_call.1} parent=11 // pred_fallthru
          _
        // Predicated region
        $region25: #{tpu_custom_call.1} parent=11 // pred_check
          %p188 = pneg %p138
        $region26: #{tpu_custom_call.1} parent=11 // pred_check_branch
          %190 = sbr.rel (%p188) target = $region28
        $region27: #{tpu_custom_call.1} parent=11 // pred_region
          _
        $region28: #{tpu_custom_call.1} parent=11 // pred_fallthru
          _
      $region12: #{tpu_custom_call.1} parent=5 // pred_fallthru
        _
      %p191 = scmp.lt.s32.totalorder %s14, 2
      // Predicated region
      $region29: #{tpu_custom_call.1} parent=5 // pred_check
        %p192 = pneg %p191
      $region30: #{tpu_custom_call.1} parent=5 // pred_check_branch
        %194 = sbr.rel (%p192) target = $region32
      $region31: #{tpu_custom_call.1} parent=5 // pred_region
        // Predicated region
        $region33: #{tpu_custom_call.1} parent=31 // pred_check
          %p195 = pneg %p48
        $region34: #{tpu_custom_call.1} parent=31 // pred_check_branch
          %197 = sbr.rel (%p195) target = $region36
        $region35: #{tpu_custom_call.1} parent=31 // pred_region
          %s198 = smul.u32 2, %s22
          %p199 = scmp.lt.s32.totalorder %s21, 1
          %s200 = scalar_select %p199, %s21, 1
          %p201 = scmp.lt.s32.totalorder %s198, 1
          %s202 = scalar_select %p201, %s198, 1
          %s203 = smul.addr %s200, 2
          %s204 = sadd.s32 %s202, %s203
          %s205 = smul.addr %s204, 4
          %s206 = scalar_lea.vmem %s0, %s205
          %s207 = smul.u32 2, %s22
        $region36: #{tpu_custom_call.1} parent=31 // pred_fallthru
          _
      $region32: #{tpu_custom_call.1} parent=5 // pred_fallthru
        _
      %p208 = scmp.le.s32.totalorder 1, %s14
      %p209 = scmp.lt.s32.totalorder %s14, 3
      %p210 = pnand %p208, %p209
      %p211 = pneg %p210
      // Predicated region
      $region37: #{tpu_custom_call.1} parent=5 // pred_check
        _
      $region38: #{tpu_custom_call.1} parent=5 // pred_check_branch
        %213 = sbr.rel (%p210) target = $region40
      $region39: #{tpu_custom_call.1} parent=5 // pred_region
        %s214 = ssub.s32 %s14, 1
        %s215 = smul.u32 2, %s24
        %p216 = scmp.lt.s32.totalorder %s23, 1
        %s217 = scalar_select %p216, %s23, 1
        %p218 = scmp.lt.s32.totalorder %s215, 1
        %s219 = scalar_select %p218, %s215, 1
        %s220 = smul.addr %s217, 2
        %s221 = sadd.s32 %s219, %s220
        %s222 = smul.addr %s221, 4
        %s223 = scalar_lea.vmem %s0, %s222
        %p224 = pneg %p54
        %p225 = pneg %p51
        %p226 = pneg %p75
        %p227 = pneg %p72
        %p228 = pneg %p96
        %p229 = pneg %p93
        %p230 = pneg %p117
        %p231 = pneg %p114
        %p232 = pneg %p138
        %p233 = pneg %p135
        %p234 = pneg %p164
        %p235 = pneg %p161
        %s236 = sand.u32 %s151, 1
        %s237 = scalar_lea.sflag [#allocation3], %s236
        %s238 = sand.u32 %s151, 1
        %s239 = scalar_lea.vmem [#allocation2], %s238
        %s240 = smul.u32 2, %s24
        %p241 = scmp.lt.s32.totalorder %s23, 1
        %s242 = scalar_select %p241, %s23, 1
        %p243 = scmp.lt.s32.totalorder %s240, 1
        %s244 = scalar_select %p243, %s240, 1
        %s245 = smul.addr %s242, 2
        %s246 = sadd.s32 %s244, %s245
        %s247 = smul.addr %s246, 4
        %s248 = scalar_lea.vmem %s0, %s247
        %s249 = smul.u32 2, %s24
        %v251 = vld [vmem:[%s248] sm:$0xf]
        %v252 = vld [vmem:[%s248 + $0x4] sm:$0xf]
        %v253 = vld [vmem:[%s1] sm:$0x3]
        %v254 = vld [vmem:[%s2] sm:$0x1]
        %v256 = vlaneseq
        %v257 = vshrl.u32 %v256, 7
        %v258 = vsub.s32 0, %v257
        %v259 = vrot.slane %v254, %v258
        %v263 = vunpack.c.l.b16 %v251
        %v264 = vunpack.c.l.b16 %v252
        %v265 = vpack.c.b16 %v264, %v263
        %vm266 = vcmask 31744
        %v268 = vsel %vm266, %v265, 0
        %vm270 = vcmask 1041408
        %v272 = vsel %vm270, %v253, 0
        %274 = vmatprep.subr.bf16.mxu0 0
        %275 = vmatpush1.bf16.msra.mxu0 %v272
        %276 = vmatprep.subr.bf16.mxu0 0
        %277 = vmatpush1.bf16.msra.mxu0 0
        %278 = vmatprep.subr.bf16.mxu0 0
        %279 = vmatpush1.bf16.msra.mxu0 0
        %280 = vmatprep.subr.bf16.mxu0 0
        %281 = vmatpush1.bf16.msra.mxu0 0
        %282 = vmatprep.subr.bf16.mxu0 0
        %283 = vmatpush1.bf16.msra.mxu0 0
        %284 = vmatprep.subr.bf16.mxu0 0
        %285 = vmatpush1.bf16.msra.mxu0 0
        %286 = vmatprep.subr.bf16.mxu0 0
        %287 = vmatpush1.bf16.msra.mxu0 0
        %288 = vmatprep.subr.bf16.mxu0 0
        %289 = vmatpush1.bf16.msra.mxu0 0
        %290 = vmatprep.subr.bf16.mxu0 0
        %291 = vmatpush1.bf16.msra.mxu0 0
        %292 = vmatprep.subr.bf16.mxu0 0
        %293 = vmatpush1.bf16.msra.mxu0 0
        %294 = vmatprep.subr.bf16.mxu0 0
        %295 = vmatpush1.bf16.msra.mxu0 0
        %296 = vmatprep.subr.bf16.mxu0 0
        %297 = vmatpush1.bf16.msra.mxu0 0
        %298 = vmatprep.subr.bf16.mxu0 0
        %299 = vmatpush1.bf16.msra.mxu0 0
        %300 = vmatprep.subr.bf16.mxu0 0
        %301 = vmatpush1.bf16.msra.mxu0 0
        %302 = vmatprep.subr.bf16.mxu0 0
        %303 = vmatpush1.bf16.msra.mxu0 0
        %304 = vmatprep.subr.bf16.mxu0 0
        %305 = vmatpush1.bf16.msra.mxu0 0
        %306 = vmatprep.mubr.bf16.mxu0 0
        %307 = vmatmul.mubr.bf16.gmra.mrb[0].mxu0 %v268
        %v308 = vpop.f32.mrb[0].mxu0
        %v309 = vadd.f32 %v259, %v308
        %v310 = vpop.f32.mrb[0].mxu0
        %v311 = vpop.f32.mrb[0].mxu0
        %v312 = vadd.f32 %v259, %v311
        %v313 = vpop.f32.mrb[0].mxu0
        %314 = vdwg.mxu0
        %v315 = vmax.f32 %v309, 0.0
        %v316 = vmax.f32 %v312, 0.0
        %v317 = vpack.c.bf16 %v316, %v315
        %v318 = vld [vmem:[%s3] sm:$0xf]
        %v319 = vld [vmem:[%s3 + $0x4] sm:$0xf]
        %v320 = vld [vmem:[%s3 + $0x8] sm:$0xf]
        %v321 = vld [vmem:[%s3 + $0xc] sm:$0xf]
        %v322 = vld [vmem:[%s3 + $0x10] sm:$0xf]
        %v323 = vld [vmem:[%s3 + $0x14] sm:$0xf]
        %v324 = vld [vmem:[%s3 + $0x18] sm:$0xf]
        %v325 = vld [vmem:[%s3 + $0x1c] sm:$0xf]
        %v326 = vld [vmem:[%s4] sm:$0x1]
        %v328 = vlaneseq
        %v329 = vshrl.u32 %v328, 7
        %v330 = vsub.s32 0, %v329
        %v331 = vrot.slane %v326, %v330
        %v341 = vunpack.c.l.b16 %v318
        %v342 = vunpack.c.l.b16 %v319
        %v343 = vunpack.c.l.b16 %v320
        %v344 = vunpack.c.l.b16 %v321
        %v345 = vunpack.c.l.b16 %v322
        %v346 = vunpack.c.l.b16 %v323
        %v347 = vunpack.c.l.b16 %v324
        %v348 = vunpack.c.l.b16 %v325
        %v349 = vpack.c.b16 %v342, %v341
        %v350 = vpack.c.b16 %v344, %v343
        %v351 = vpack.c.b16 %v346, %v345
        %v352 = vpack.c.b16 %v348, %v347
        %vm357 = vcmask 523264
        %v359 = vsel %vm357, %v317, 0
        %361 = vmatprep.subr.bf16.mxu0 0
        %362 = vmatpush1.bf16.msra.mxu0 %v349
        %363 = vmatprep.subr.bf16.mxu0 0
        %364 = vmatpush1.bf16.msra.mxu0 %v350
        %365 = vmatprep.subr.bf16.mxu0 0
        %366 = vmatpush1.bf16.msra.mxu0 %v351
        %367 = vmatprep.subr.bf16.mxu0 0
        %368 = vmatpush1.bf16.msra.mxu0 %v352
        %369 = vmatprep.subr.bf16.mxu0 0
        %370 = vmatpush1.bf16.msra.mxu0 0
        %371 = vmatprep.subr.bf16.mxu0 0
        %372 = vmatpush1.bf16.msra.mxu0 0
        %373 = vmatprep.subr.bf16.mxu0 0
        %374 = vmatpush1.bf16.msra.mxu0 0
        %375 = vmatprep.subr.bf16.mxu0 0
        %376 = vmatpush1.bf16.msra.mxu0 0
        %377 = vmatprep.subr.bf16.mxu0 0
        %378 = vmatpush1.bf16.msra.mxu0 0
        %379 = vmatprep.subr.bf16.mxu0 0
        %380 = vmatpush1.bf16.msra.mxu0 0
        %381 = vmatprep.subr.bf16.mxu0 0
        %382 = vmatpush1.bf16.msra.mxu0 0
        %383 = vmatprep.subr.bf16.mxu0 0
        %384 = vmatpush1.bf16.msra.mxu0 0
        %385 = vmatprep.subr.bf16.mxu0 0
        %386 = vmatpush1.bf16.msra.mxu0 0
        %387 = vmatprep.subr.bf16.mxu0 0
        %388 = vmatpush1.bf16.msra.mxu0 0
        %389 = vmatprep.subr.bf16.mxu0 0
        %390 = vmatpush1.bf16.msra.mxu0 0
        %391 = vmatprep.subr.bf16.mxu0 0
        %392 = vmatpush1.bf16.msra.mxu0 0
        %393 = vmatprep.mubr.bf16.mxu0 0
        %394 = vmatmul.mubr.bf16.gmra.mrb[0].mxu0 %v359
        %v395 = vpop.f32.mrb[0].mxu0
        %v396 = vadd.f32 %v331, %v395
        %v397 = vpop.f32.mrb[0].mxu0
        %v398 = vpop.f32.mrb[0].mxu0
        %v399 = vadd.f32 %v331, %v398
        %v400 = vpop.f32.mrb[0].mxu0
        %401 = vdwg.mxu0
        %v402 = vmax.f32 %v396, 0.0
        %v403 = vmax.f32 %v399, 0.0
        %vm404 = vcmask 261120
        %v405 = vsel %vm404, %v402, -inf
        %v406 = vsel %vm404, %v403, -inf
        %v407 = vmax.f32 %v405, %v406
        %v408 = vrot.slane %v407, 4
        %v409 = vmax.f32 %v407, %v408
        %v410 = vrot.slane %v409, 2
        %v411 = vmax.f32 %v409, %v410
        %v412 = vrot.slane %v411, 1
        %v413 = vmax.f32 %v411, %v412
        %p414 = scmp.eq.s32.totalorder %s24, 0
        // Predicated region
        $region41: #{tpu_custom_call.1} parent=39 // pred_check
          %p415 = pneg %p414
        $region42: #{tpu_custom_call.1} parent=39 // pred_check_branch
          %417 = sbr.rel (%p415) target = $region44
        $region43: #{tpu_custom_call.1} parent=39 // pred_region
          %vm418 = vcmask 253952
          %419 = vst.msk [vmem:[%s239] sm:$0x1] %vm418, %v413
        $region44: #{tpu_custom_call.1} parent=39 // pred_fallthru
          _
        %p420 = scmp.gt.s32.totalorder %s24, 0
        // Predicated region
        $region45: #{tpu_custom_call.1} parent=39 // pred_check
          %p421 = pneg %p420
        $region46: #{tpu_custom_call.1} parent=39 // pred_check_branch
          %423 = sbr.rel (%p421) target = $region48
        $region47: #{tpu_custom_call.1} parent=39 // pred_region
          %v424 = vld [vmem:[%s239] sm:$0x1]
          %v425 = vmax.f32 %v424, %v413
          %vm426 = vcmask 253952
          %427 = vst.msk [vmem:[%s239] sm:$0x1] %vm426, %v425
        $region48: #{tpu_custom_call.1} parent=39 // pred_fallthru
          _
        %s428 = sand.u32 %s151, 1
        %s429 = scalar_lea.sflag [#allocation3], %s428
        %s430 = sand.u32 %s151, 1
        %s431 = scalar_lea.vmem [#allocation2], %s430
        // Predicated region
        $region49: #{tpu_custom_call.1} parent=39 // pred_check
          %p432 = pneg %p161
        $region50: #{tpu_custom_call.1} parent=39 // pred_check_branch
          %434 = sbr.rel (%p432) target = $region52
        $region51: #{tpu_custom_call.1} parent=39 // pred_region
          %s436 = ssub.s32 16, 16
          %437 = vsyncadd %s429, %s436
          %s438 = smul.addr %s23, 16
          %s439 = scalar_lea.hbm %s5, %s438
          %s441 = sshll.u32 %s431, 4
          %s442 = int_to_ptr.vmem [resolvable:$true] %s441
          %444 = dma.vmem_to_hbm [thread:$0]  %s442, 16, %s439, %s429
        $region52: #{tpu_custom_call.1} parent=39 // pred_fallthru
          _
      $region40: #{tpu_custom_call.1} parent=5 // pred_fallthru
        _
      %p445 = scmp.le.s32.totalorder 2, %s14
      // Predicated region
      $region53: #{tpu_custom_call.1} parent=5 // pred_check
        %p446 = pneg %p445
      $region54: #{tpu_custom_call.1} parent=5 // pred_check_branch
        %448 = sbr.rel (%p446) target = $region56
      $region55: #{tpu_custom_call.1} parent=5 // pred_region
        %s449 = ssub.s32 %s14, 2
        // Predicated region
        $region57: #{tpu_custom_call.1} parent=55 // pred_check
          %p450 = pneg %p167
        $region58: #{tpu_custom_call.1} parent=55 // pred_check_branch
          %452 = sbr.rel (%p450) target = $region60
        $region59: #{tpu_custom_call.1} parent=55 // pred_region
          %s453 = sand.u32 %s152, 1
          %s454 = scalar_lea.sflag [#allocation3], %s453
          %s455 = sand.u32 %s152, 1
          %s456 = scalar_lea.vmem [#allocation2], %s455
          %457 = dma.done %s454, 16
        $region60: #{tpu_custom_call.1} parent=55 // pred_fallthru
          _
      $region56: #{tpu_custom_call.1} parent=5 // pred_fallthru
        _
    $region6: #{tpu_custom_call.1} parent=1 // loop_footer
      %s18 = sadd.s32 1, %s14
    $region7: #{tpu_custom_call.1} parent=1 // loop_footer_branch
      %13 = sbr.rel target = $region3
    $region8: #{tpu_custom_call.1} parent=1 // loop_exit
      _
    %458 = vsyncpa [#allocation3], 1
    %s459 = scalar_lea.sflag [#allocation3], 1
    %460 = vsyncpa %s459, 1

</llo_original>
